<compile_context>
chip_gen: v7x
topology: tpu7x:2x2x1
jax: 0.10.0
libtpu: 0.0.40
codegen_flags: <defaults>
</compile_context>

<pallas_src>
import functools

import jax
import jax.numpy as jnp
from jax.experimental import pallas as pl
from jax.experimental.pallas import tpu as pltpu

_LANE = 128
_SUBLANE = 8


def _round_up(x, m):
    return (x + m - 1) // m * m


def _cdiv(a, b):
    return (a + b - 1) // b


# ---------------------------------------------------------------------------
# One-time parameter preparation (model init).
# ---------------------------------------------------------------------------
def prepare_salt_decoder(w_pt, b, *, tn_target=512, tk_target=512,
                         k_collapse_max=2048, weight_dtype=jnp.bfloat16):
    """One-time transform of nn.Linear params for the Pallas decoder kernel.

    w_pt: [O, H] (PyTorch layout), b: [O].
    Returns (w_prep [Kp, Np], b_prep [1, Np] f32, meta) with the weight already
    transposed, padded to the kernel tiling and cast, so the per-call path does
    not re-read / re-write the weight (the dominant HBM stream for decode).
    """
    O, H = w_pt.shape

    # K (reduction) tiling: collapse to one block when it fits comfortably in
    # VMEM -> no accumulator, no per-k grid overhead.
    if H <= k_collapse_max:
        tk, Kp = H, H
    else:
        nk = _cdiv(H, tk_target)
        tk = _round_up(_cdiv(H, nk), _LANE)
        Kp = nk * tk

    # N tiling: a single full-extent block for modest O (no pad, no post-slice);
    # wide lane-dense 128-multiple tiles minimizing padding for vocab-sized O.
    if O <= tn_target:
        tn, Np = O, O
    else:
        n_tiles = _cdiv(O, tn_target)
        tn = _round_up(_cdiv(O, n_tiles), _LANE)
        Np = n_tiles * tn

    w_prep = jnp.transpose(w_pt)                       # [H, O]
    if (Kp, Np) != (H, O):
        w_prep = jnp.pad(w_prep, ((0, Kp - H), (0, Np - O)))
    w_prep = w_prep.astype(weight_dtype)

    b_prep = b.astype(jnp.float32)
    if Np != O:
        b_prep = jnp.pad(b_prep, (0, Np - O))
    b_prep = b_prep.reshape(1, Np)

    meta = dict(H=H, O=O, Kp=Kp, Np=Np, tk=tk, tn=tn)
    return w_prep, b_prep, meta


# ---------------------------------------------------------------------------
# Kernels.
# ---------------------------------------------------------------------------
def _decoder_kernel_single_k(x_ref, w_ref, b_ref, o_ref):
    # Whole reduction in one block: one MXU pass, bias fused into the store.
    o_ref[...] = (
        jnp.dot(x_ref[...], w_ref[...], preferred_element_type=jnp.float32)
        + b_ref[...]
    ).astype(o_ref.dtype)


def _decoder_kernel_tiled_k(x_ref, w_ref, b_ref, o_ref):
    # The f32 output block doubles as the accumulator (no VMEM scratch).
    k = pl.program_id(2)

    @pl.when(k == 0)
    def _():
        o_ref[...] = jnp.broadcast_to(b_ref[...], o_ref.shape).astype(o_ref.dtype)

    o_ref[...] += jnp.dot(x_ref[...], w_ref[...],
                          preferred_element_type=jnp.float32)


# ---------------------------------------------------------------------------
# Per-call forward.
# ---------------------------------------------------------------------------
@functools.partial(
    jax.jit,
    static_argnames=("H", "O", "Kp", "Np", "tk", "tn", "tm_target"))
def salt_decoder_apply(x, w_prep, b_prep, *, H, O, Kp, Np, tk, tn, tm_target=512):
    """y = x @ W_pt.T + b, with weights already prepared by prepare_salt_decoder."""
    B = x.shape[0]

    # Adaptive M tile: a single full-extent block for decode-sized batches
    # (no padding at all), else the multiple-of-8 tile that minimizes Mp - B.
    if B <= tm_target:
        tm, Mp = B, B
    else:
        nm_tiles = _cdiv(B, tm_target)
        tm = _round_up(_cdiv(B, nm_tiles), _SUBLANE)
        Mp = nm_tiles * tm

    x_p = x
    if (Mp, Kp) != (B, H):
        x_p = jnp.pad(x_p, ((0, Mp - B), (0, Kp - H)))
    x_p = x_p.astype(w_prep.dtype)     # bf16 stream into the MXU, f32 accumulate

    nm, nn_, nk = Mp // tm, Np // tn, Kp // tk

    # True HBM footprint: W (and bias) re-streamed per M tile, x per N tile.
    x_bytes = Mp * Kp * x_p.dtype.itemsize
    w_bytes = Kp * Np * w_prep.dtype.itemsize
    b_bytes = Np * b_prep.dtype.itemsize
    o_bytes = Mp * Np * 4
    cost = pl.CostEstimate(
        flops=2 * Mp * Kp * Np,
        transcendentals=0,
        bytes_accessed=x_bytes * nn_ + (w_bytes + b_bytes) * nm + o_bytes,
    )

    # Double-buffered working set (bf16 inputs, f32 output-as-accumulator);
    # kept well inside v7x's 64 MiB physical VMEM for the default tiles.
    in_itemsize = jnp.dtype(w_prep.dtype).itemsize
    working_set = 2 * (tm * tk + tk * tn) * in_itemsize + 2 * (tm * tn + tn) * 4
    vmem_limit = int(min(64 * 1024 * 1024, max(2 * working_set, 16 * 1024 * 1024)))

    if nk == 1:
        kernel = _decoder_kernel_single_k
        grid = (nm, nn_)
        in_specs = [
            pl.BlockSpec((tm, tk), lambda i, j: (i, 0)),   # x tile
            pl.BlockSpec((tk, tn), lambda i, j: (0, j)),   # W tile
            pl.BlockSpec((1, tn), lambda i, j: (0, j)),    # bias tile (N only)
        ]
        out_specs = pl.BlockSpec((tm, tn), lambda i, j: (i, j))
        dim_sem = ("parallel", "parallel")
    else:
        kernel = _decoder_kernel_tiled_k
        grid = (nm, nn_, nk)
        in_specs = [
            pl.BlockSpec((tm, tk), lambda i, j, k: (i, k)),
            pl.BlockSpec((tk, tn), lambda i, j, k: (k, j)),
            pl.BlockSpec((1, tn), lambda i, j, k: (0, j)),
        ]
        out_specs = pl.BlockSpec((tm, tn), lambda i, j, k: (i, j))
        dim_sem = ("parallel", "parallel", "arbitrary")

    out_p = pl.pallas_call(
        kernel,
        out_shape=jax.ShapeDtypeStruct((Mp, Np), jnp.float32),
        grid_spec=pltpu.PrefetchScalarGridSpec(
            num_scalar_prefetch=0,
            grid=grid,
            in_specs=in_specs,
            out_specs=out_specs,
        ),
        compiler_params=pltpu.CompilerParams(
            dimension_semantics=dim_sem,
            vmem_limit_bytes=vmem_limit,
        ),
        cost_estimate=cost,
    )(x_p, w_prep, b_prep)

    if (Mp, Np) != (B, O):
        # Only taken when padding was actually needed; aligned / small shapes
        # return the kernel output directly (no extra HBM copy).
        out_p = out_p[:B, :O]
    return out_p


if __name__ == "__main__":
    hidden_dim = 32
    output_dim = 16
    batch = 8

    key = jax.random.PRNGKey(0)
    kx, kw, kb = jax.random.split(key, 3)

    # nn.Linear(hidden_dim, output_dim): weight (O, H), bias (O,).
    w_pt = jax.random.normal(kw, (output_dim, hidden_dim), dtype=jnp.float32) * 0.1
    b = jax.random.normal(kb, (output_dim,), dtype=jnp.float32) * 0.1
    x = jax.random.normal(kx, (batch, hidden_dim), dtype=jnp.float32)

    # One-time weight prep (model init), then the per-call forward.
    w_prep, b_prep, meta = prepare_salt_decoder(w_pt, b)
    out = salt_decoder_apply(x, w_prep, b_prep, **meta)
    out = jax.block_until_ready(out)

    # References: tight check against bf16-matched compute, loose check against
    # full-f32 math (operands are intentionally streamed as bf16).
    ref_bf16 = (
        jnp.dot(
            x.astype(jnp.bfloat16),
            jnp.transpose(w_pt).astype(jnp.bfloat16),
            preferred_element_type=jnp.float32,
        )
        + b[None, :]
    )
    ref_f32 = x @ jnp.transpose(w_pt) + b[None, :]

    assert out.shape == (batch, output_dim)
    assert jnp.allclose(out, ref_bf16, atol=1e-3, rtol=1e-3), "bf16-matched mismatch"
    assert jnp.allclose(out, ref_f32, atol=3e-2, rtol=3e-2), "f32 reference mismatch"

    print("KERNEL_OK")
</pallas_src>

<mosaic_0001>
module attributes {stable_mosaic.version = 11 : i64} {
  func.func @_decoder_kernel_single_k(%arg0: i32, %arg1: i32, %arg2: memref<8x32xbf16, #tpu.memory_space<vmem>>, %arg3: memref<32x16xbf16, #tpu.memory_space<vmem>>, %arg4: memref<1x16xf32, #tpu.memory_space<vmem>>, %arg5: memref<8x16xf32, #tpu.memory_space<vmem>>) attributes {dimension_semantics = [#tpu.dimension_semantics<parallel>, #tpu.dimension_semantics<parallel>], iteration_bounds = array<i64: 1, 1>, scalar_prefetch = 0 : i64, scratch_operands = 0 : i64, tpu.core_type = #tpu.core_type<tc>, window_params = [{transform_indices = @transform_0, window_bounds = array<i64: 8, 32>}, {transform_indices = @transform_1, window_bounds = array<i64: 32, 16>}, {transform_indices = @transform_2, window_bounds = array<i64: 1, 16>}, {transform_indices = @transform_3, window_bounds = array<i64: 8, 16>}]} {
    %c0 = arith.constant 0 : index
    %c0_0 = arith.constant 0 : index
    %0 = vector.load %arg2[%c0, %c0_0] : memref<8x32xbf16, #tpu.memory_space<vmem>>, vector<8x32xbf16>
    %c0_1 = arith.constant 0 : index
    %c0_2 = arith.constant 0 : index
    %1 = vector.load %arg3[%c0_1, %c0_2] : memref<32x16xbf16, #tpu.memory_space<vmem>>, vector<32x16xbf16>
    %cst = arith.constant dense<0.000000e+00> : vector<8x16xf32>
    %2 = tpu.matmul %0, %1, %cst {dimension_numbers = #tpu.dot_dimension_numbers<[1], [0], [0], [1], [0, 0, 1, 1], [], []>} : vector<8x32xbf16>, vector<32x16xbf16>, vector<8x16xf32> -> vector<8x16xf32>
    %c0_3 = arith.constant 0 : index
    %c0_4 = arith.constant 0 : index
    %3 = vector.load %arg4[%c0_3, %c0_4] : memref<1x16xf32, #tpu.memory_space<vmem>>, vector<1x16xf32>
    %4 = vector.broadcast %3 : vector<1x16xf32> to vector<8x16xf32>
    %5 = arith.addf %2, %4 : vector<8x16xf32>
    %c0_5 = arith.constant 0 : index
    %c0_6 = arith.constant 0 : index
    %6 = vector.load %arg5[%c0_5, %c0_6] : memref<8x16xf32, #tpu.memory_space<vmem>>, vector<8x16xf32>
    tpu.vector_store %arg5[%c0_5, %c0_6], %5 {strides = array<i32>} : memref<8x16xf32, #tpu.memory_space<vmem>>, vector<8x16xf32>,
    return
  }
  func.func @transform_0(%arg0: i32, %arg1: i32) -> (i32, i32) {
    %c0_i32 = arith.constant 0 : i32
    %c0_i32_0 = arith.constant 0 : i32
    return %arg0, %c0_i32 : i32, i32
  }
  func.func @transform_1(%arg0: i32, %arg1: i32) -> (i32, i32) {
    %c0_i32 = arith.constant 0 : i32
    %c0_i32_0 = arith.constant 0 : i32
    return %c0_i32, %arg1 : i32, i32
  }
  func.func @transform_2(%arg0: i32, %arg1: i32) -> (i32, i32) {
    %c0_i32 = arith.constant 0 : i32
    %c0_i32_0 = arith.constant 0 : i32
    return %c0_i32, %arg1 : i32, i32
  }
  func.func @transform_3(%arg0: i32, %arg1: i32) -> (i32, i32) {
    %c0_i32 = arith.constant 0 : i32
    return %arg0, %arg1 : i32, i32
  }
}

</mosaic_0001>

<llo_original>
// kernel: salt_decoder_apply.1
$region0: #{salt_decoder_apply.1}
  #allocation0 [shape = 'u32[]', space=smem, size = 0x4, offset = 0x4, fixed_abs, tag = 'smem constant byte address 0x4 - core index']
  #allocation1 [shape = 'u32[144,128]{1,0:T(1,128)}', space=vmem, size = 0x12000, scoped, tag = 'internal scratch']
  %s0 = inlined_call_operand.vmem [shape: bf16[8,32], index: 0, kind: input, shape index: {}]
  %s1 = inlined_call_operand.vmem [shape: bf16[32,16], index: 1, kind: input, shape index: {}]
  %s2 = inlined_call_operand.vmem [shape: f32[1,16], index: 2, kind: input, shape index: {}]
  %s3 = inlined_call_operand.hbm [shape: f32[8,16], index: 3, kind: output, shape index: {}]
  %s4 = sld [smem:[#allocation0]]
  $region22: #{salt_decoder_apply.1} parent=0
    _
  %s6 = ssub.s32 1, %s4
  %s7 = scalar_select 0, %s6, %s4
  $region1: #{salt_decoder_apply.1} parent=0
    #allocation2 [shape = 'u8[4096]{0}', space=vmem, size = 0x1000, scoped, tag = 'output window, operand 0, single buffered']
    #allocation3 [shape = 's32[1]{0}', space=sflag, size = 0x4, scoped, tag = 'scoped memory for salt_decoder_apply.1']
    %8 = vsyncpa [#allocation3], 0
    // Predicated region
    $region2: #{salt_decoder_apply.1} parent=1 // pred_check
      _
    $region3: #{salt_decoder_apply.1} parent=1 // pred_check_branch
      %10 = sbr.rel (0) target = $region5
    $region4: #{salt_decoder_apply.1} parent=1 // pred_region
      _
    $region5: #{salt_decoder_apply.1} parent=1 // pred_fallthru
      _
    // Predicated region
    $region6: #{salt_decoder_apply.1} parent=1 // pred_check
      _
    $region7: #{salt_decoder_apply.1} parent=1 // pred_check_branch
      %12 = sbr.rel (0) target = $region9
    $region8: #{salt_decoder_apply.1} parent=1 // pred_region
      _
    $region9: #{salt_decoder_apply.1} parent=1 // pred_fallthru
      _
    // Predicated region
    $region10: #{salt_decoder_apply.1} parent=1 // pred_check
      _
    $region11: #{salt_decoder_apply.1} parent=1 // pred_check_branch
      %14 = sbr.rel (0) target = $region13
    $region12: #{salt_decoder_apply.1} parent=1 // pred_region
      _
    $region13: #{salt_decoder_apply.1} parent=1 // pred_fallthru
      _
    %v16 = vld [vmem:[%s0] sm:$0xf]
    %v17 = vld [vmem:[%s1] sm:$0xf]
    %v18 = vld [vmem:[%s1 + $0x4] sm:$0xf]
    %v19 = vld [vmem:[%s1 + $0x8] sm:$0xf]
    %v20 = vld [vmem:[%s1 + $0xc] sm:$0xf]
    %v21 = vld [vmem:[%s2] sm:$0x1]
    %v23 = vlaneseq
    %v24 = vshrl.u32 %v23, 7
    %v25 = vsub.s32 0, %v24
    %v26 = vrot.slane %v21, %v25
    %v32 = vunpack.c.l.b16 %v17
    %v33 = vunpack.c.l.b16 %v18
    %v34 = vunpack.c.l.b16 %v19
    %v35 = vunpack.c.l.b16 %v20
    %v36 = vpack.c.b16 %v33, %v32
    %v37 = vpack.c.b16 %v35, %v34
    %vm40 = vcmask 261120
    %v42 = vsel %vm40, %v16, 0
    %44 = vmatprep.subr.bf16.mxu0 0
    %45 = vmatpush1.bf16.msra.mxu0 %v36
    %46 = vmatprep.subr.bf16.mxu0 0
    %47 = vmatpush1.bf16.msra.mxu0 %v37
    %48 = vmatprep.subr.bf16.mxu0 0
    %49 = vmatpush1.bf16.msra.mxu0 0
    %50 = vmatprep.subr.bf16.mxu0 0
    %51 = vmatpush1.bf16.msra.mxu0 0
    %52 = vmatprep.subr.bf16.mxu0 0
    %53 = vmatpush1.bf16.msra.mxu0 0
    %54 = vmatprep.subr.bf16.mxu0 0
    %55 = vmatpush1.bf16.msra.mxu0 0
    %56 = vmatprep.subr.bf16.mxu0 0
    %57 = vmatpush1.bf16.msra.mxu0 0
    %58 = vmatprep.subr.bf16.mxu0 0
    %59 = vmatpush1.bf16.msra.mxu0 0
    %60 = vmatprep.subr.bf16.mxu0 0
    %61 = vmatpush1.bf16.msra.mxu0 0
    %62 = vmatprep.subr.bf16.mxu0 0
    %63 = vmatpush1.bf16.msra.mxu0 0
    %64 = vmatprep.subr.bf16.mxu0 0
    %65 = vmatpush1.bf16.msra.mxu0 0
    %66 = vmatprep.subr.bf16.mxu0 0
    %67 = vmatpush1.bf16.msra.mxu0 0
    %68 = vmatprep.subr.bf16.mxu0 0
    %69 = vmatpush1.bf16.msra.mxu0 0
    %70 = vmatprep.subr.bf16.mxu0 0
    %71 = vmatpush1.bf16.msra.mxu0 0
    %72 = vmatprep.subr.bf16.mxu0 0
    %73 = vmatpush1.bf16.msra.mxu0 0
    %74 = vmatprep.subr.bf16.mxu0 0
    %75 = vmatpush1.bf16.msra.mxu0 0
    %76 = vmatprep.mubr.bf16.mxu0 0
    %77 = vmatmul.mubr.bf16.gmra.mrb[0].mxu0 %v42
    %v78 = vpop.f32.mrb[0].mxu0
    %v79 = vadd.f32 %v26, %v78
    %v80 = vpop.f32.mrb[0].mxu0
    %v81 = vpop.f32.mrb[0].mxu0
    %v82 = vpop.f32.mrb[0].mxu0
    %83 = vdwg.mxu0
    %vm84 = vcmask 130048
    %85 = vst.msk [vmem:[#allocation2] sm:$0xff] %vm84, %v79
    // Predicated region
    $region14: #{salt_decoder_apply.1} parent=1 // pred_check
      _
    $region15: #{salt_decoder_apply.1} parent=1 // pred_check_branch
      %87 = sbr.rel (0) target = $region17
    $region16: #{salt_decoder_apply.1} parent=1 // pred_region
      %s89 = ssub.s32 128, 128
      %90 = vsyncadd [#allocation3], %s89
      %s92 = sshll.u32 [#allocation2], 4
      %s93 = int_to_ptr.vmem [resolvable:$true] %s92
      %95 = dma.vmem_to_hbm [thread:$0]  %s93, 128, %s3, [#allocation3]
    $region17: #{salt_decoder_apply.1} parent=1 // pred_fallthru
      _
    // Predicated region
    $region18: #{salt_decoder_apply.1} parent=1 // pred_check
      _
    $region19: #{salt_decoder_apply.1} parent=1 // pred_check_branch
      %97 = sbr.rel (0) target = $region21
    $region20: #{salt_decoder_apply.1} parent=1 // pred_region
      %98 = dma.done [#allocation3], 128
    $region21: #{salt_decoder_apply.1} parent=1 // pred_fallthru
      _
    %99 = vsyncpa [#allocation3], 1

</llo_original>
